<compile_context>
chip_gen: v6e
topology: v6e:2x2x1
jax: 0.10.0
libtpu: 0.0.40
codegen_flags: <defaults>
</compile_context>

<pallas_src>
import functools

import jax
import jax.numpy as jnp
from jax.experimental import pallas as pl
from jax.experimental.pallas import tpu as pltpu


def _round_up(n, m):
    return (n + m - 1) // m * m


def _mlp_kernel(x_ref, w1_ref, b1_ref, w2_ref, b2_ref, out_ref, *,
                out_valid, use_softmax):
    # x: (TM, IN) f32 streamed; w1: (IN, HID_p) bf16 resident; b1: (1, HID_p) f32.
    x = x_ref[...].astype(jnp.bfloat16)          # cast in-kernel (VPU), not in HBM
    hidden = jnp.dot(x, w1_ref[...], preferred_element_type=jnp.float32)
    hidden = hidden + b1_ref[...]                # f32 bias add, broadcasts over rows
    relu = jnp.maximum(hidden, 0.0)              # f32 epilogue (v5e has no bf16 VPU)

    logits = jnp.dot(relu.astype(jnp.bfloat16), w2_ref[...],
                     preferred_element_type=jnp.float32)
    logits = logits + b2_ref[...]

    if use_softmax:
        # Padded output lanes carry zero weights/bias; mask them out of the softmax.
        lane = jax.lax.broadcasted_iota(jnp.int32, logits.shape, dimension=1)
        masked = jnp.where(lane < out_valid, logits, jnp.float32(-1e30))
        m = jnp.max(masked, axis=-1, keepdims=True)
        e = jnp.exp(masked - m)
        out = e * pl.reciprocal(jnp.sum(e, axis=-1, keepdims=True), approx=True)
    else:
        out = logits

    out_ref[...] = out.astype(out_ref.dtype)


def mlp_prepack(w1, b1, w2, b2):
    """One-time weight/bias packing (do NOT call per forward step).

    Casts matmul operands to bf16 and pads the hidden/output feature dims to
    multiples of 128 so both matmul N dims and the output store are lane-dense.
    The input (K) dim of w1 is left unpadded so x needs no lane padding.
    """
    in_size, hid_size = w1.shape
    out_size = w2.shape[1]
    hid_p = _round_up(hid_size, 128)
    out_p = _round_up(out_size, 128)
    # TODO(synk): on v6e/v7x pad hid/out to multiples of 256 (2x256x256 MXU) once
    # this kernel becomes compute-bound at real model sizes; 128 is ideal on v5e.
    return dict(
        w1=jnp.pad(w1.astype(jnp.bfloat16), ((0, 0), (0, hid_p - hid_size))),
        b1=jnp.pad(jnp.reshape(b1, (1, -1)).astype(jnp.float32),
                   ((0, 0), (0, hid_p - hid_size))),
        w2=jnp.pad(w2.astype(jnp.bfloat16),
                   ((0, hid_p - hid_size), (0, out_p - out_size))),
        b2=jnp.pad(jnp.reshape(b2, (1, -1)).astype(jnp.float32),
                   ((0, 0), (0, out_p - out_size))),
        in_size=in_size, hid_size=hid_size, out_size=out_size,
    )


def _pick_tile_rows(B, tile_rows):
    """Row tile: 16-row aligned (bf16 output sublane pack), minimal tail waste,
    and >=8 grid steps for large B so each v7x TensorCore pipelines >=4 steps."""
    if B <= tile_rows:
        return _round_up(max(B, 16), 16)
    n_steps = pl.cdiv(B, tile_rows)
    if B >= 8 * 128 and n_steps < 8:
        n_steps = 8
    return _round_up(pl.cdiv(B, n_steps), 16)


def mlp_forward(x, params, *, use_softmax, tile_rows=256, unpad=True):
    """x: [B, in_size] float32; params from mlp_prepack.

    Returns [B, out_size] float32 when unpad=True, otherwise the padded bf16
    [B_pad, out_pad] buffer (consumers that can read padded lanes should use
    unpad=False and fold the slice away)."""
    B, in_size = x.shape
    assert in_size == params["in_size"]
    out_size = params["out_size"]
    hid_p = params["w1"].shape[1]
    out_p = params["w2"].shape[1]

    tm = _pick_tile_rows(B, tile_rows)
    b_p = _round_up(B, tm)

    # Only batch-row padding of x; no lane padding, no dtype cast in the wrapper.
    if b_p != B:
        x = jnp.pad(x, ((0, b_p - B), (0, 0)))

    grid = (b_p // tm,)
    kernel = functools.partial(_mlp_kernel, out_valid=out_size,
                               use_softmax=use_softmax)

    flops = 2 * b_p * (in_size * hid_p + hid_p * out_p)
    bytes_accessed = (b_p * in_size * 4                       # streamed x (f32)
                      + params["w1"].size * 2 + params["w2"].size * 2
                      + params["b1"].size * 4 + params["b2"].size * 4
                      + b_p * out_p * 2)                      # bf16 output
    transcendentals = b_p * out_p if use_softmax else 0

    # TODO(synk): add a K-grid axis ("arbitrary", last) with an f32 VMEM
    # accumulator + single-buffered weight blocks once hidden/feature dims grow
    # beyond the VMEM budget (earlier on v7x's 64 MiB than on v6e's 128 MiB);
    # the fully weight-resident grid below is sufficient at these sizes.
    out_padded = pl.pallas_call(
        kernel,
        out_shape=jax.ShapeDtypeStruct((b_p, out_p), jnp.bfloat16),
        grid_spec=pltpu.PrefetchScalarGridSpec(
            num_scalar_prefetch=0,
            grid=grid,
            in_specs=[
                pl.BlockSpec((tm, in_size), lambda i: (i, 0)),    # streamed f32 x
                pl.BlockSpec((in_size, hid_p), lambda i: (0, 0)), # resident bf16 W1
                pl.BlockSpec((1, hid_p), lambda i: (0, 0)),       # resident f32 b1
                pl.BlockSpec((hid_p, out_p), lambda i: (0, 0)),   # resident bf16 W2
                pl.BlockSpec((1, out_p), lambda i: (0, 0)),       # resident f32 b2
            ],
            out_specs=pl.BlockSpec((tm, out_p), lambda i: (i, 0)),
        ),
        compiler_params=pltpu.CompilerParams(
            dimension_semantics=("parallel",),      # megacore sharding on v7x
            vmem_limit_bytes=48 * 1024 * 1024,      # safe under v7x's 64 MiB VMEM
        ),
        cost_estimate=pl.CostEstimate(
            flops=flops,
            transcendentals=transcendentals,
            bytes_accessed=bytes_accessed,
        ),
    )(x, params["w1"], params["b1"], params["w2"], params["b2"])

    if unpad:
        return out_padded[:B, :out_size].astype(jnp.float32)
    return out_padded


def _init_linear(key, fan_in, fan_out):
    """Deterministic init mimicking nn.Linear default (uniform +/- 1/sqrt(fan_in)).
    Returns W with shape [fan_in, fan_out] (transposed vs. PyTorch) and b [1, fan_out]."""
    kw, kb = jax.random.split(key)
    bound = 1.0 / jnp.sqrt(jnp.float32(fan_in))
    w = jax.random.uniform(kw, (fan_in, fan_out), jnp.float32, -bound, bound)
    b = jax.random.uniform(kb, (1, fan_out), jnp.float32, -bound, bound)
    return w, b


def _reference(x, w1, b1, w2, b2, use_softmax):
    h = jnp.maximum(x @ w1 + b1, 0.0)
    o = h @ w2 + b2
    if use_softmax:
        o = jax.nn.softmax(o, axis=-1)
    return o


if __name__ == "__main__":
    # Shapes consistent with the module's forward: x is [batch, input_size].
    # batch=500 is deliberately NOT a multiple of the 256-row tile -> exercises
    # the batch grid (2 steps) plus row padding and the final unpad path.
    batch = 500
    input_size = 16
    hidden_size = 32
    output_size = 8

    key = jax.random.PRNGKey(0)
    kx, k1, k2 = jax.random.split(key, 3)

    x = jax.random.normal(kx, (batch, input_size), jnp.float32)
    w1, b1 = _init_linear(k1, input_size, hidden_size)
    w2, b2 = _init_linear(k2, hidden_size, output_size)

    params = mlp_prepack(w1, b1, w2, b2)   # one-time packing, reused per call

    for use_softmax in (True, False):
        out = mlp_forward(x, params, use_softmax=use_softmax)
        out = jax.block_until_ready(out)
        ref = _reference(x, w1, b1, w2, b2, use_softmax)
        assert out.shape == (batch, output_size)
        # bf16 matmul operands + bf16 output store + approx reciprocal are
        # intentional; relaxed tolerance vs the f32 reference covers them.
        assert jnp.allclose(out, ref, atol=2e-2, rtol=2e-2), (
            f"mismatch vs. JAX reference (use_softmax={use_softmax})")

    print("KERNEL_OK")
</pallas_src>

<mosaic_0001>
module attributes {stable_mosaic.version = 11 : i64} {
  func.func @_mlp_kernel(%arg0: i32, %arg1: memref<256x16xf32, #tpu.memory_space<vmem>>, %arg2: memref<16x128xbf16, #tpu.memory_space<vmem>>, %arg3: memref<1x128xf32, #tpu.memory_space<vmem>>, %arg4: memref<128x128xbf16, #tpu.memory_space<vmem>>, %arg5: memref<1x128xf32, #tpu.memory_space<vmem>>, %arg6: memref<256x128xbf16, #tpu.memory_space<vmem>>) attributes {dimension_semantics = [#tpu.dimension_semantics<parallel>], iteration_bounds = array<i64: 2>, scalar_prefetch = 0 : i64, scratch_operands = 0 : i64, tpu.core_type = #tpu.core_type<tc>, window_params = [{transform_indices = @transform_0, window_bounds = array<i64: 256, 16>}, {pipeline_mode = #tpu.pipeline_mode<synchronous>, transform_indices = @transform_1, window_bounds = array<i64: 16, 128>}, {pipeline_mode = #tpu.pipeline_mode<synchronous>, transform_indices = @transform_2, window_bounds = array<i64: 1, 128>}, {pipeline_mode = #tpu.pipeline_mode<synchronous>, transform_indices = @transform_3, window_bounds = array<i64: 128, 128>}, {pipeline_mode = #tpu.pipeline_mode<synchronous>, transform_indices = @transform_4, window_bounds = array<i64: 1, 128>}, {transform_indices = @transform_5, window_bounds = array<i64: 256, 128>}]} {
    %c0 = arith.constant 0 : index
    %c0_0 = arith.constant 0 : index
    %0 = vector.load %arg1[%c0, %c0_0] : memref<256x16xf32, #tpu.memory_space<vmem>>, vector<256x16xf32>
    %1 = arith.truncf %0 : vector<256x16xf32> to vector<256x16xbf16>
    %c0_1 = arith.constant 0 : index
    %c0_2 = arith.constant 0 : index
    %2 = vector.load %arg2[%c0_1, %c0_2] : memref<16x128xbf16, #tpu.memory_space<vmem>>, vector<16x128xbf16>
    %cst = arith.constant dense<0.000000e+00> : vector<256x128xf32>
    %3 = tpu.matmul %1, %2, %cst {dimension_numbers = #tpu.dot_dimension_numbers<[1], [0], [0], [1], [0, 0, 1, 1], [], []>} : vector<256x16xbf16>, vector<16x128xbf16>, vector<256x128xf32> -> vector<256x128xf32>
    %c0_3 = arith.constant 0 : index
    %c0_4 = arith.constant 0 : index
    %4 = vector.load %arg3[%c0_3, %c0_4] : memref<1x128xf32, #tpu.memory_space<vmem>>, vector<1x128xf32>
    %5 = vector.broadcast %4 : vector<1x128xf32> to vector<256x128xf32>
    %6 = arith.addf %3, %5 : vector<256x128xf32>
    %cst_5 = arith.constant 0.000000e+00 : f32
    %7 = vector.broadcast %cst_5 : f32 to vector<256x128xf32>
    %8 = arith.maximumf %6, %7 : vector<256x128xf32>
    %9 = arith.truncf %8 : vector<256x128xf32> to vector<256x128xbf16>
    %c0_6 = arith.constant 0 : index
    %c0_7 = arith.constant 0 : index
    %10 = vector.load %arg4[%c0_6, %c0_7] : memref<128x128xbf16, #tpu.memory_space<vmem>>, vector<128x128xbf16>
    %cst_8 = arith.constant dense<0.000000e+00> : vector<256x128xf32>
    %11 = tpu.matmul %9, %10, %cst_8 {dimension_numbers = #tpu.dot_dimension_numbers<[1], [0], [0], [1], [0, 0, 1, 1], [], []>} : vector<256x128xbf16>, vector<128x128xbf16>, vector<256x128xf32> -> vector<256x128xf32>
    %c0_9 = arith.constant 0 : index
    %c0_10 = arith.constant 0 : index
    %12 = vector.load %arg5[%c0_9, %c0_10] : memref<1x128xf32, #tpu.memory_space<vmem>>, vector<1x128xf32>
    %13 = vector.broadcast %12 : vector<1x128xf32> to vector<256x128xf32>
    %14 = arith.addf %11, %13 : vector<256x128xf32>
    %15 = tpu.iota {dimensions = array<i32: 1>} : vector<256x128xi32>
    %c8_i32 = arith.constant 8 : i32
    %16 = vector.broadcast %c8_i32 : i32 to vector<256x128xi32>
    %17 = arith.cmpi slt, %15, %16 : vector<256x128xi32>
    %cst_11 = arith.constant -1.000000e+30 : f32
    %18 = vector.broadcast %cst_11 : f32 to vector<256x128xf32>
    %19 = arith.select %17, %14, %18 : vector<256x128xi1>, vector<256x128xf32>
    %cst_12 = arith.constant dense<0xFF800000> : vector<256xf32>
    %20 = vector.multi_reduction <maximumf>, %19, %cst_12 [1] : vector<256x128xf32> to vector<256xf32>
    %21 = vector.shape_cast %20 : vector<256xf32> to vector<256x1xf32>
    %22 = vector.broadcast %21 : vector<256x1xf32> to vector<256x128xf32>
    %23 = arith.subf %19, %22 : vector<256x128xf32>
    %24 = math.exp %23 : vector<256x128xf32>
    %cst_13 = arith.constant dense<0.000000e+00> : vector<256xf32>
    %25 = vector.multi_reduction <add>, %24, %cst_13 [1] : vector<256x128xf32> to vector<256xf32>
    %26 = vector.shape_cast %25 : vector<256xf32> to vector<256x1xf32>
    %27 = tpu.reciprocal %26 {approx = true} : vector<256x1xf32> -> vector<256x1xf32>
    %28 = vector.broadcast %27 : vector<256x1xf32> to vector<256x128xf32>
    %29 = arith.mulf %24, %28 : vector<256x128xf32>
    %30 = arith.truncf %29 : vector<256x128xf32> to vector<256x128xbf16>
    %c0_14 = arith.constant 0 : index
    %c0_15 = arith.constant 0 : index
    %31 = vector.load %arg6[%c0_14, %c0_15] : memref<256x128xbf16, #tpu.memory_space<vmem>>, vector<256x128xbf16>
    tpu.vector_store %arg6[%c0_14, %c0_15], %30 {strides = array<i32>} : memref<256x128xbf16, #tpu.memory_space<vmem>>, vector<256x128xbf16>,
    return
  }
  func.func @transform_0(%arg0: i32) -> (i32, i32) {
    %c0_i32 = arith.constant 0 : i32
    %c0_i32_0 = arith.constant 0 : i32
    return %arg0, %c0_i32 : i32, i32
  }
  func.func @transform_1(%arg0: i32) -> (i32, i32) {
    %c0_i32 = arith.constant 0 : i32
    %c0_i32_0 = arith.constant 0 : i32
    %c0_i32_1 = arith.constant 0 : i32
    return %c0_i32, %c0_i32_0 : i32, i32
  }
  func.func @transform_2(%arg0: i32) -> (i32, i32) {
    %c0_i32 = arith.constant 0 : i32
    %c0_i32_0 = arith.constant 0 : i32
    %c0_i32_1 = arith.constant 0 : i32
    return %c0_i32, %c0_i32_0 : i32, i32
  }
  func.func @transform_3(%arg0: i32) -> (i32, i32) {
    %c0_i32 = arith.constant 0 : i32
    %c0_i32_0 = arith.constant 0 : i32
    %c0_i32_1 = arith.constant 0 : i32
    return %c0_i32, %c0_i32_0 : i32, i32
  }
  func.func @transform_4(%arg0: i32) -> (i32, i32) {
    %c0_i32 = arith.constant 0 : i32
    %c0_i32_0 = arith.constant 0 : i32
    %c0_i32_1 = arith.constant 0 : i32
    return %c0_i32, %c0_i32_0 : i32, i32
  }
  func.func @transform_5(%arg0: i32) -> (i32, i32) {
    %c0_i32 = arith.constant 0 : i32
    %c0_i32_0 = arith.constant 0 : i32
    return %arg0, %c0_i32 : i32, i32
  }
}

</mosaic_0001>

<llo_original>
// kernel: tpu_custom_call.1
$region0: #{tpu_custom_call.1}
  #allocation0 [shape = 'u32[]', space=smem, size = 0x4, offset = 0x4, fixed_abs, tag = 'smem constant byte address 0x4 - core index']
  #allocation1 [shape = 'u32[144,128]{1,0:T(1,128)}', space=vmem, size = 0x12000, scoped, tag = 'internal scratch']
  %s0 = inlined_call_operand.vmem [shape: f32[512,16], index: 0, kind: input, shape index: {}]
  %s1 = inlined_call_operand.vmem [shape: bf16[16,128], index: 1, kind: input, shape index: {}]
  %s2 = inlined_call_operand.vmem [shape: f32[1,128], index: 2, kind: input, shape index: {}]
  %s3 = inlined_call_operand.vmem [shape: bf16[128,128], index: 3, kind: input, shape index: {}]
  %s4 = inlined_call_operand.vmem [shape: f32[1,128], index: 4, kind: input, shape index: {}]
  %s5 = inlined_call_operand.hbm [shape: bf16[512,128], index: 5, kind: output, shape index: {}]
  %s6 = sld [smem:[#allocation0]]
  $region53: #{tpu_custom_call.1} parent=0
    _
  %s8 = ssub.s32 1, %s6
  %s9 = scalar_select 0, %s8, %s6
  $region1: #{tpu_custom_call.1} parent=0
    #allocation2 [shape = 'u8[131072]{0}', space=vmem, size = 0x20000, scoped, tag = 'output window, operand 0']
    #allocation3 [shape = 's32[2]{0}', space=sflag, size = 0x8, scoped, tag = 'scoped memory for tpu_custom_call.1']
    %10 = vsyncpa [#allocation3], 0
    %s11 = scalar_lea.sflag [#allocation3], 1
    %12 = vsyncpa %s11, 0
    loop: start=0, step=1, limit=4
    $region2: #{tpu_custom_call.1} parent=1 // loop_pre_header
      _
    $region3: #{tpu_custom_call.1} parent=1 // loop_header
      %s14 = sphi 0, %s18
      %p15 = scmp.ge.s32.totalorder %s14, 4
      %s24 = sphi 0, %s26
      %s27 = sphi 0, %s24
      %s28 = sphi 0, %s27
      %s44 = sphi 0, %s28
      %s48 = sphi 0, %s48
      %s50 = sphi 0, %s48
      %s51 = sphi 0, %s50
      %s65 = sphi 0, %s51
      %s69 = sphi 0, %s69
      %s71 = sphi 0, %s69
      %s72 = sphi 0, %s71
      %s86 = sphi 0, %s72
      %s90 = sphi 0, %s90
      %s92 = sphi 0, %s90
      %s93 = sphi 0, %s92
      %s107 = sphi 0, %s93
      %s111 = sphi 0, %s111
      %s113 = sphi 0, %s111
      %s114 = sphi 0, %s113
      %s128 = sphi 0, %s114
      %s134 = sphi 0, %s136
      %s137 = sphi 0, %s134
      %s138 = sphi 0, %s137
      %s154 = sphi 0, %s138
    $region4: #{tpu_custom_call.1} parent=1 // loop_header_branch
      %17 = sbr.rel (%p15) target = $region8
    $region5: #{tpu_custom_call.1} parent=1 // loop_body
      %s19 = ssub.s32 %s14, 1
      %s20 = ssub.s32 %s14, 2
      %s21 = sadd.s32 %s14, 1
      %s22 = ssub.s32 %s14, %s21
      %p23 = scmp.eq.s32.totalorder %s22, 0
      %s25 = sadd.s32 %s24, 1
      %s26 = scalar_select %p23, %s24, %s25
      %p29 = pneg %p23
      %p30 = scmp.eq.s32.totalorder %s14, 1
      %p31 = por %p29, %p30
      %p32 = scmp.ne.s32.totalorder %s24, %s27
      %p33 = scmp.eq.s32.totalorder %s14, 0
      %p34 = por %p32, %p33
      %p35 = scmp.ne.s32.totalorder %s24, %s27
      %p36 = scmp.eq.s32.totalorder %s19, 1
      %p37 = por %p35, %p36
      %p38 = scmp.ne.s32.totalorder %s27, %s28
      %p39 = scmp.eq.s32.totalorder %s19, 0
      %p40 = por %p38, %p39
      %p41 = scmp.ne.s32.totalorder %s27, %s28
      %p42 = scmp.eq.s32.totalorder %s20, 1
      %p43 = por %p41, %p42
      %p45 = scmp.ne.s32.totalorder %s28, %s44
      %p46 = scmp.eq.s32.totalorder %s20, 0
      %p47 = por %p45, %p46
      %s49 = sadd.s32 %s48, 1
      %p52 = scmp.eq.s32.totalorder %s14, 1
      %p53 = scmp.ne.s32.totalorder %s48, %s50
      %p54 = scmp.eq.s32.totalorder %s14, 0
      %p55 = por %p53, %p54
      %p56 = scmp.ne.s32.totalorder %s48, %s50
      %p57 = scmp.eq.s32.totalorder %s19, 1
      %p58 = por %p56, %p57
      %p59 = scmp.ne.s32.totalorder %s50, %s51
      %p60 = scmp.eq.s32.totalorder %s19, 0
      %p61 = por %p59, %p60
      %p62 = scmp.ne.s32.totalorder %s50, %s51
      %p63 = scmp.eq.s32.totalorder %s20, 1
      %p64 = por %p62, %p63
      %p66 = scmp.ne.s32.totalorder %s51, %s65
      %p67 = scmp.eq.s32.totalorder %s20, 0
      %p68 = por %p66, %p67
      %s70 = sadd.s32 %s69, 1
      %p73 = scmp.eq.s32.totalorder %s14, 1
      %p74 = scmp.ne.s32.totalorder %s69, %s71
      %p75 = scmp.eq.s32.totalorder %s14, 0
      %p76 = por %p74, %p75
      %p77 = scmp.ne.s32.totalorder %s69, %s71
      %p78 = scmp.eq.s32.totalorder %s19, 1
      %p79 = por %p77, %p78
      %p80 = scmp.ne.s32.totalorder %s71, %s72
      %p81 = scmp.eq.s32.totalorder %s19, 0
      %p82 = por %p80, %p81
      %p83 = scmp.ne.s32.totalorder %s71, %s72
      %p84 = scmp.eq.s32.totalorder %s20, 1
      %p85 = por %p83, %p84
      %p87 = scmp.ne.s32.totalorder %s72, %s86
      %p88 = scmp.eq.s32.totalorder %s20, 0
      %p89 = por %p87, %p88
      %s91 = sadd.s32 %s90, 1
      %p94 = scmp.eq.s32.totalorder %s14, 1
      %p95 = scmp.ne.s32.totalorder %s90, %s92
      %p96 = scmp.eq.s32.totalorder %s14, 0
      %p97 = por %p95, %p96
      %p98 = scmp.ne.s32.totalorder %s90, %s92
      %p99 = scmp.eq.s32.totalorder %s19, 1
      %p100 = por %p98, %p99
      %p101 = scmp.ne.s32.totalorder %s92, %s93
      %p102 = scmp.eq.s32.totalorder %s19, 0
      %p103 = por %p101, %p102
      %p104 = scmp.ne.s32.totalorder %s92, %s93
      %p105 = scmp.eq.s32.totalorder %s20, 1
      %p106 = por %p104, %p105
      %p108 = scmp.ne.s32.totalorder %s93, %s107
      %p109 = scmp.eq.s32.totalorder %s20, 0
      %p110 = por %p108, %p109
      %s112 = sadd.s32 %s111, 1
      %p115 = scmp.eq.s32.totalorder %s14, 1
      %p116 = scmp.ne.s32.totalorder %s111, %s113
      %p117 = scmp.eq.s32.totalorder %s14, 0
      %p118 = por %p116, %p117
      %p119 = scmp.ne.s32.totalorder %s111, %s113
      %p120 = scmp.eq.s32.totalorder %s19, 1
      %p121 = por %p119, %p120
      %p122 = scmp.ne.s32.totalorder %s113, %s114
      %p123 = scmp.eq.s32.totalorder %s19, 0
      %p124 = por %p122, %p123
      %p125 = scmp.ne.s32.totalorder %s113, %s114
      %p126 = scmp.eq.s32.totalorder %s20, 1
      %p127 = por %p125, %p126
      %p129 = scmp.ne.s32.totalorder %s114, %s128
      %p130 = scmp.eq.s32.totalorder %s20, 0
      %p131 = por %p129, %p130
      %s132 = ssub.s32 %s14, %s21
      %p133 = scmp.eq.s32.totalorder %s132, 0
      %s135 = sadd.s32 %s134, 1
      %s136 = scalar_select %p133, %s134, %s135
      %p139 = pneg %p133
      %p140 = scmp.eq.s32.totalorder %s14, 1
      %p141 = por %p139, %p140
      %p142 = scmp.ne.s32.totalorder %s134, %s137
      %p143 = scmp.eq.s32.totalorder %s14, 0
      %p144 = por %p142, %p143
      %p145 = scmp.ne.s32.totalorder %s134, %s137
      %p146 = scmp.eq.s32.totalorder %s19, 1
      %p147 = por %p145, %p146
      %p148 = scmp.ne.s32.totalorder %s137, %s138
      %p149 = scmp.eq.s32.totalorder %s19, 0
      %p150 = por %p148, %p149
      %p151 = scmp.ne.s32.totalorder %s137, %s138
      %p152 = scmp.eq.s32.totalorder %s20, 1
      %p153 = por %p151, %p152
      %p155 = scmp.ne.s32.totalorder %s138, %s154
      %p156 = scmp.eq.s32.totalorder %s20, 0
      %p157 = por %p155, %p156
      %p158 = scmp.le.s32.totalorder 1, %s14
      %p159 = scmp.lt.s32.totalorder %s14, 3
      %p160 = pnand %p158, %p159
      %p161 = pneg %p160
      // Predicated region
      $region9: #{tpu_custom_call.1} parent=5 // pred_check
        _
      $region10: #{tpu_custom_call.1} parent=5 // pred_check_branch
        %163 = sbr.rel (%p160) target = $region12
      $region11: #{tpu_custom_call.1} parent=5 // pred_region
        %s164 = ssub.s32 %s14, 1
        // Predicated region
        $region13: #{tpu_custom_call.1} parent=11 // pred_check
          %p165 = pneg %p61
        $region14: #{tpu_custom_call.1} parent=11 // pred_check_branch
          %167 = sbr.rel (%p165) target = $region16
        $region15: #{tpu_custom_call.1} parent=11 // pred_region
          _
        $region16: #{tpu_custom_call.1} parent=11 // pred_fallthru
          _
        // Predicated region
        $region17: #{tpu_custom_call.1} parent=11 // pred_check
          %p168 = pneg %p82
        $region18: #{tpu_custom_call.1} parent=11 // pred_check_branch
          %170 = sbr.rel (%p168) target = $region20
        $region19: #{tpu_custom_call.1} parent=11 // pred_region
          _
        $region20: #{tpu_custom_call.1} parent=11 // pred_fallthru
          _
        // Predicated region
        $region21: #{tpu_custom_call.1} parent=11 // pred_check
          %p171 = pneg %p103
        $region22: #{tpu_custom_call.1} parent=11 // pred_check_branch
          %173 = sbr.rel (%p171) target = $region24
        $region23: #{tpu_custom_call.1} parent=11 // pred_region
          _
        $region24: #{tpu_custom_call.1} parent=11 // pred_fallthru
          _
        // Predicated region
        $region25: #{tpu_custom_call.1} parent=11 // pred_check
          %p174 = pneg %p124
        $region26: #{tpu_custom_call.1} parent=11 // pred_check_branch
          %176 = sbr.rel (%p174) target = $region28
        $region27: #{tpu_custom_call.1} parent=11 // pred_region
          _
        $region28: #{tpu_custom_call.1} parent=11 // pred_fallthru
          _
      $region12: #{tpu_custom_call.1} parent=5 // pred_fallthru
        _
      %p177 = scmp.lt.s32.totalorder %s14, 2
      // Predicated region
      $region29: #{tpu_custom_call.1} parent=5 // pred_check
        %p178 = pneg %p177
      $region30: #{tpu_custom_call.1} parent=5 // pred_check_branch
        %180 = sbr.rel (%p178) target = $region32
      $region31: #{tpu_custom_call.1} parent=5 // pred_region
        // Predicated region
        $region33: #{tpu_custom_call.1} parent=31 // pred_check
          %p181 = pneg %p34
        $region34: #{tpu_custom_call.1} parent=31 // pred_check_branch
          %183 = sbr.rel (%p181) target = $region36
        $region35: #{tpu_custom_call.1} parent=31 // pred_region
          %s184 = smul.u32 32, %s14
          %p185 = scmp.lt.s32.totalorder %s184, 63
          %s186 = scalar_select %p185, %s184, 63
          %s187 = smul.addr %s186, 8
          %s188 = scalar_lea.vmem %s0, %s187
          %s189 = smul.u32 32, %s14
        $region36: #{tpu_custom_call.1} parent=31 // pred_fallthru
          _
      $region32: #{tpu_custom_call.1} parent=5 // pred_fallthru
        _
      %p190 = scmp.le.s32.totalorder 1, %s14
      %p191 = scmp.lt.s32.totalorder %s14, 3
      %p192 = pnand %p190, %p191
      %p193 = pneg %p192
      // Predicated region
      $region37: #{tpu_custom_call.1} parent=5 // pred_check
        _
      $region38: #{tpu_custom_call.1} parent=5 // pred_check_branch
        %195 = sbr.rel (%p192) target = $region40
      $region39: #{tpu_custom_call.1} parent=5 // pred_region
        %s196 = ssub.s32 %s14, 1
        %s197 = smul.u32 32, %s19
        %p198 = scmp.lt.s32.totalorder %s197, 63
        %s199 = scalar_select %p198, %s197, 63
        %s200 = smul.addr %s199, 8
        %s201 = scalar_lea.vmem %s0, %s200
        %p202 = pneg %p40
        %p203 = pneg %p37
        %p204 = pneg %p61
        %p205 = pneg %p58
        %p206 = pneg %p82
        %p207 = pneg %p79
        %p208 = pneg %p103
        %p209 = pneg %p100
        %p210 = pneg %p124
        %p211 = pneg %p121
        %p212 = pneg %p150
        %p213 = pneg %p147
        %s214 = sand.u32 %s137, 1
        %s215 = scalar_lea.sflag [#allocation3], %s214
        %s216 = sand.u32 %s137, 1
        %s217 = smul.addr %s216, 128
        %s218 = scalar_lea.vmem [#allocation2], %s217
        %s219 = smul.u32 32, %s19
        %p220 = scmp.lt.s32.totalorder %s219, 63
        %s221 = scalar_select %p220, %s219, 63
        %s222 = smul.addr %s221, 8
        %s223 = scalar_lea.vmem %s0, %s222
        %s224 = smul.u32 32, %s19
        %s225 = smul.u32 32, %s19
        %v227 = vld [vmem:[%s223] sm:$0xff]
        %v228 = vld [vmem:[%s223 + $0x8] sm:$0xff]
        %v229 = vld [vmem:[%s223 + $0x10] sm:$0xff]
        %v230 = vld [vmem:[%s223 + $0x18] sm:$0xff]
        %v231 = vld [vmem:[%s223 + $0x20] sm:$0xff]
        %v232 = vld [vmem:[%s223 + $0x28] sm:$0xff]
        %v233 = vld [vmem:[%s223 + $0x30] sm:$0xff]
        %v234 = vld [vmem:[%s223 + $0x38] sm:$0xff]
        %v235 = vld [vmem:[%s223 + $0x40] sm:$0xff]
        %v236 = vld [vmem:[%s223 + $0x48] sm:$0xff]
        %v237 = vld [vmem:[%s223 + $0x50] sm:$0xff]
        %v238 = vld [vmem:[%s223 + $0x58] sm:$0xff]
        %v239 = vld [vmem:[%s223 + $0x60] sm:$0xff]
        %v240 = vld [vmem:[%s223 + $0x68] sm:$0xff]
        %v241 = vld [vmem:[%s223 + $0x70] sm:$0xff]
        %v242 = vld [vmem:[%s223 + $0x78] sm:$0xff]
        %v243 = vld [vmem:[%s223 + $0x80] sm:$0xff]
        %v244 = vld [vmem:[%s223 + $0x88] sm:$0xff]
        %v245 = vld [vmem:[%s223 + $0x90] sm:$0xff]
        %v246 = vld [vmem:[%s223 + $0x98] sm:$0xff]
        %v247 = vld [vmem:[%s223 + $0xa0] sm:$0xff]
        %v248 = vld [vmem:[%s223 + $0xa8] sm:$0xff]
        %v249 = vld [vmem:[%s223 + $0xb0] sm:$0xff]
        %v250 = vld [vmem:[%s223 + $0xb8] sm:$0xff]
        %v251 = vld [vmem:[%s223 + $0xc0] sm:$0xff]
        %v252 = vld [vmem:[%s223 + $0xc8] sm:$0xff]
        %v253 = vld [vmem:[%s223 + $0xd0] sm:$0xff]
        %v254 = vld [vmem:[%s223 + $0xd8] sm:$0xff]
        %v255 = vld [vmem:[%s223 + $0xe0] sm:$0xff]
        %v256 = vld [vmem:[%s223 + $0xe8] sm:$0xff]
        %v257 = vld [vmem:[%s223 + $0xf0] sm:$0xff]
        %v258 = vld [vmem:[%s223 + $0xf8] sm:$0xff]
        %v259 = vpack.c.bf16 %v228, %v227
        %v260 = vpack.c.bf16 %v230, %v229
        %v261 = vpack.c.bf16 %v232, %v231
        %v262 = vpack.c.bf16 %v234, %v233
        %v263 = vpack.c.bf16 %v236, %v235
        %v264 = vpack.c.bf16 %v238, %v237
        %v265 = vpack.c.bf16 %v240, %v239
        %v266 = vpack.c.bf16 %v242, %v241
        %v267 = vpack.c.bf16 %v244, %v243
        %v268 = vpack.c.bf16 %v246, %v245
        %v269 = vpack.c.bf16 %v248, %v247
        %v270 = vpack.c.bf16 %v250, %v249
        %v271 = vpack.c.bf16 %v252, %v251
        %v272 = vpack.c.bf16 %v254, %v253
        %v273 = vpack.c.bf16 %v256, %v255
        %v274 = vpack.c.bf16 %v258, %v257
        %v275 = vld [vmem:[%s1] sm:$0xf]
        %v276 = vld [vmem:[%s1 + $0x4] sm:$0xf]
        %v277 = vld [vmem:[%s2] sm:$0x1]
        %v279 = vlaneseq
        %v280 = vshrl.u32 %v279, 7
        %v281 = vsub.s32 0, %v280
        %v282 = vrot.slane %v277, %v281
        %v286 = vunpack.c.l.b16 %v275
        %v287 = vunpack.c.l.b16 %v276
        %v288 = vpack.c.b16 %v287, %v286
        %vm290 = vcmask 130048
        %v292 = vsel %vm290, %v259, 0
        %v295 = vsel %vm290, %v260, 0
        %v298 = vsel %vm290, %v261, 0
        %v301 = vsel %vm290, %v262, 0
        %v304 = vsel %vm290, %v263, 0
        %v307 = vsel %vm290, %v264, 0
        %v310 = vsel %vm290, %v265, 0
        %v313 = vsel %vm290, %v266, 0
        %v316 = vsel %vm290, %v267, 0
        %v319 = vsel %vm290, %v268, 0
        %v322 = vsel %vm290, %v269, 0
        %v325 = vsel %vm290, %v270, 0
        %v328 = vsel %vm290, %v271, 0
        %v331 = vsel %vm290, %v272, 0
        %v334 = vsel %vm290, %v273, 0
        %v337 = vsel %vm290, %v274, 0
        %339 = vmatprep.subr.bf16.mxu0 0
        %340 = vmatpush1.bf16.msra.mxu0 0
        %341 = vmatprep.subr.bf16.mxu0 0
        %342 = vmatpush1.bf16.msra.mxu0 0
        %343 = vmatprep.subr.bf16.mxu0 0
        %344 = vmatpush1.bf16.msra.mxu0 0
        %345 = vmatprep.subr.bf16.mxu0 0
        %346 = vmatpush1.bf16.msra.mxu0 0
        %347 = vmatprep.subr.bf16.mxu0 0
        %348 = vmatpush1.bf16.msra.mxu0 0
        %349 = vmatprep.subr.bf16.mxu0 0
        %350 = vmatpush1.bf16.msra.mxu0 0
        %351 = vmatprep.subr.bf16.mxu0 0
        %352 = vmatpush1.bf16.msra.mxu0 0
        %353 = vmatprep.subr.bf16.mxu0 0
        %354 = vmatpush1.bf16.msra.mxu0 %v288
        %355 = vmatprep.subr.bf16.mxu0 0
        %356 = vmatpush2.bf16.msra.mxu0 0
        %357 = vmatprep.subr.bf16.mxu0 0
        %358 = vmatpush2.bf16.msra.mxu0 0
        %359 = vmatprep.subr.bf16.mxu0 0
        %360 = vmatpush2.bf16.msra.mxu0 0
        %361 = vmatprep.subr.bf16.mxu0 0
        %362 = vmatpush2.bf16.msra.mxu0 0
        %363 = vmatprep.subr.bf16.mxu0 0
        %364 = vmatpush2.bf16.msra.mxu0 0
        %365 = vmatprep.subr.bf16.mxu0 0
        %366 = vmatpush2.bf16.msra.mxu0 0
        %367 = vmatprep.subr.bf16.mxu0 0
        %368 = vmatpush2.bf16.msra.mxu0 0
        %369 = vmatprep.subr.bf16.mxu0 0
        %370 = vmatpush2.bf16.msra.mxu0 0
        %371 = vmatprep.mubr.bf16.mxu0 0
        %372 = vmatmul.mubr.bf16.gmra.mxu0 %v292
        %v373 = vpop.f32.mrf.mxu0
        %v374 = vadd.f32 %v282, %v373
        %v375 = vpop.f32.mrf.mxu0
        %v376 = vpop.f32.mrf.mxu0
        %v377 = vadd.f32 %v282, %v376
        %v378 = vpop.f32.mrf.mxu0
        %379 = vmatprep.mubr.bf16.mxu0 0
        %380 = vmatmul.mubr.bf16.gmra.mxu0 %v295
        %v381 = vpop.f32.mrf.mxu0
        %v382 = vadd.f32 %v282, %v381
        %v383 = vpop.f32.mrf.mxu0
        %v384 = vpop.f32.mrf.mxu0
        %v385 = vadd.f32 %v282, %v384
        %v386 = vpop.f32.mrf.mxu0
        %387 = vmatprep.mubr.bf16.mxu0 0
        %388 = vmatmul.mubr.bf16.gmra.mxu0 %v298
        %v389 = vpop.f32.mrf.mxu0
        %v390 = vadd.f32 %v282, %v389
        %v391 = vpop.f32.mrf.mxu0
        %v392 = vpop.f32.mrf.mxu0
        %v393 = vadd.f32 %v282, %v392
        %v394 = vpop.f32.mrf.mxu0
        %395 = vmatprep.mubr.bf16.mxu0 0
        %396 = vmatmul.mubr.bf16.gmra.mxu0 %v301
        %v397 = vpop.f32.mrf.mxu0
        %v398 = vadd.f32 %v282, %v397
        %v399 = vpop.f32.mrf.mxu0
        %v400 = vpop.f32.mrf.mxu0
        %v401 = vadd.f32 %v282, %v400
        %v402 = vpop.f32.mrf.mxu0
        %403 = vmatprep.mubr.bf16.mxu0 0
        %404 = vmatmul.mubr.bf16.gmra.mxu0 %v304
        %v405 = vpop.f32.mrf.mxu0
        %v406 = vadd.f32 %v282, %v405
        %v407 = vpop.f32.mrf.mxu0
        %v408 = vpop.f32.mrf.mxu0
        %v409 = vadd.f32 %v282, %v408
        %v410 = vpop.f32.mrf.mxu0
        %411 = vmatprep.mubr.bf16.mxu0 0
        %412 = vmatmul.mubr.bf16.gmra.mxu0 %v307
        %v413 = vpop.f32.mrf.mxu0
        %v414 = vadd.f32 %v282, %v413
        %v415 = vpop.f32.mrf.mxu0
        %v416 = vpop.f32.mrf.mxu0
        %v417 = vadd.f32 %v282, %v416
        %v418 = vpop.f32.mrf.mxu0
        %419 = vmatprep.mubr.bf16.mxu0 0
        %420 = vmatmul.mubr.bf16.gmra.mxu0 %v310
        %v421 = vpop.f32.mrf.mxu0
        %v422 = vadd.f32 %v282, %v421
        %v423 = vpop.f32.mrf.mxu0
        %v424 = vpop.f32.mrf.mxu0
        %v425 = vadd.f32 %v282, %v424
        %v426 = vpop.f32.mrf.mxu0
        %427 = vmatprep.mubr.bf16.mxu0 0
        %428 = vmatmul.mubr.bf16.gmra.mxu0 %v313
        %v429 = vpop.f32.mrf.mxu0
        %v430 = vadd.f32 %v282, %v429
        %v431 = vpop.f32.mrf.mxu0
        %v432 = vpop.f32.mrf.mxu0
        %v433 = vadd.f32 %v282, %v432
        %v434 = vpop.f32.mrf.mxu0
        %435 = vmatprep.mubr.bf16.mxu0 0
        %436 = vmatmul.mubr.bf16.gmra.mxu0 %v316
        %v437 = vpop.f32.mrf.mxu0
        %v438 = vadd.f32 %v282, %v437
        %v439 = vpop.f32.mrf.mxu0
        %v440 = vpop.f32.mrf.mxu0
        %v441 = vadd.f32 %v282, %v440
        %v442 = vpop.f32.mrf.mxu0
        %443 = vmatprep.mubr.bf16.mxu0 0
        %444 = vmatmul.mubr.bf16.gmra.mxu0 %v319
        %v445 = vpop.f32.mrf.mxu0
        %v446 = vadd.f32 %v282, %v445
        %v447 = vpop.f32.mrf.mxu0
        %v448 = vpop.f32.mrf.mxu0
        %v449 = vadd.f32 %v282, %v448
        %v450 = vpop.f32.mrf.mxu0
        %451 = vmatprep.mubr.bf16.mxu0 0
        %452 = vmatmul.mubr.bf16.gmra.mxu0 %v322
        %v453 = vpop.f32.mrf.mxu0
        %v454 = vadd.f32 %v282, %v453
        %v455 = vpop.f32.mrf.mxu0
        %v456 = vpop.f32.mrf.mxu0
        %v457 = vadd.f32 %v282, %v456
        %v458 = vpop.f32.mrf.mxu0
        %459 = vmatprep.mubr.bf16.mxu0 0
        %460 = vmatmul.mubr.bf16.gmra.mxu0 %v325
        %v461 = vpop.f32.mrf.mxu0
        %v462 = vadd.f32 %v282, %v461
        %v463 = vpop.f32.mrf.mxu0
        %v464 = vpop.f32.mrf.mxu0
        %v465 = vadd.f32 %v282, %v464
        %v466 = vpop.f32.mrf.mxu0
        %467 = vmatprep.mubr.bf16.mxu0 0
        %468 = vmatmul.mubr.bf16.gmra.mxu0 %v328
        %v469 = vpop.f32.mrf.mxu0
        %v470 = vadd.f32 %v282, %v469
        %v471 = vpop.f32.mrf.mxu0
        %v472 = vpop.f32.mrf.mxu0
        %v473 = vadd.f32 %v282, %v472
        %v474 = vpop.f32.mrf.mxu0
        %475 = vmatprep.mubr.bf16.mxu0 0
        %476 = vmatmul.mubr.bf16.gmra.mxu0 %v331
        %v477 = vpop.f32.mrf.mxu0
        %v478 = vadd.f32 %v282, %v477
        %v479 = vpop.f32.mrf.mxu0
        %v480 = vpop.f32.mrf.mxu0
        %v481 = vadd.f32 %v282, %v480
        %v482 = vpop.f32.mrf.mxu0
        %483 = vmatprep.mubr.bf16.mxu0 0
        %484 = vmatmul.mubr.bf16.gmra.mxu0 %v334
        %v485 = vpop.f32.mrf.mxu0
        %v486 = vadd.f32 %v282, %v485
        %v487 = vpop.f32.mrf.mxu0
        %v488 = vpop.f32.mrf.mxu0
        %v489 = vadd.f32 %v282, %v488
        %v490 = vpop.f32.mrf.mxu0
        %491 = vmatprep.mubr.bf16.mxu0 0
        %492 = vmatmul.mubr.bf16.gmra.mxu0 %v337
        %v493 = vpop.f32.mrf.mxu0
        %v494 = vadd.f32 %v282, %v493
        %v495 = vpop.f32.mrf.mxu0
        %v496 = vpop.f32.mrf.mxu0
        %v497 = vadd.f32 %v282, %v496
        %v498 = vpop.f32.mrf.mxu0
        %499 = vdwg.mxu0
        %v500 = vmax.f32 %v374, 0.0
        %v501 = vmax.f32 %v377, 0.0
        %v502 = vmax.f32 %v382, 0.0
        %v503 = vmax.f32 %v385, 0.0
        %v504 = vmax.f32 %v390, 0.0
        %v505 = vmax.f32 %v393, 0.0
        %v506 = vmax.f32 %v398, 0.0
        %v507 = vmax.f32 %v401, 0.0
        %v508 = vmax.f32 %v406, 0.0
        %v509 = vmax.f32 %v409, 0.0
        %v510 = vmax.f32 %v414, 0.0
        %v511 = vmax.f32 %v417, 0.0
        %v512 = vmax.f32 %v422, 0.0
        %v513 = vmax.f32 %v425, 0.0
        %v514 = vmax.f32 %v430, 0.0
        %v515 = vmax.f32 %v433, 0.0
        %v516 = vmax.f32 %v438, 0.0
        %v517 = vmax.f32 %v441, 0.0
        %v518 = vmax.f32 %v446, 0.0
        %v519 = vmax.f32 %v449, 0.0
        %v520 = vmax.f32 %v454, 0.0
        %v521 = vmax.f32 %v457, 0.0
        %v522 = vmax.f32 %v462, 0.0
        %v523 = vmax.f32 %v465, 0.0
        %v524 = vmax.f32 %v470, 0.0
        %v525 = vmax.f32 %v473, 0.0
        %v526 = vmax.f32 %v478, 0.0
        %v527 = vmax.f32 %v481, 0.0
        %v528 = vmax.f32 %v486, 0.0
        %v529 = vmax.f32 %v489, 0.0
        %v530 = vmax.f32 %v494, 0.0
        %v531 = vmax.f32 %v497, 0.0
        %v532 = vpack.c.bf16 %v501, %v500
        %v533 = vpack.c.bf16 %v503, %v502
        %v534 = vpack.c.bf16 %v505, %v504
        %v535 = vpack.c.bf16 %v507, %v506
        %v536 = vpack.c.bf16 %v509, %v508
        %v537 = vpack.c.bf16 %v511, %v510
        %v538 = vpack.c.bf16 %v513, %v512
        %v539 = vpack.c.bf16 %v515, %v514
        %v540 = vpack.c.bf16 %v517, %v516
        %v541 = vpack.c.bf16 %v519, %v518
        %v542 = vpack.c.bf16 %v521, %v520
        %v543 = vpack.c.bf16 %v523, %v522
        %v544 = vpack.c.bf16 %v525, %v524
        %v545 = vpack.c.bf16 %v527, %v526
        %v546 = vpack.c.bf16 %v529, %v528
        %v547 = vpack.c.bf16 %v531, %v530
        %v548 = vld [vmem:[%s3] sm:$0xf]
        %v549 = vld [vmem:[%s3 + $0x4] sm:$0xf]
        %v550 = vld [vmem:[%s3 + $0x8] sm:$0xf]
        %v551 = vld [vmem:[%s3 + $0xc] sm:$0xf]
        %v552 = vld [vmem:[%s3 + $0x10] sm:$0xf]
        %v553 = vld [vmem:[%s3 + $0x14] sm:$0xf]
        %v554 = vld [vmem:[%s3 + $0x18] sm:$0xf]
        %v555 = vld [vmem:[%s3 + $0x1c] sm:$0xf]
        %v556 = vld [vmem:[%s3 + $0x20] sm:$0xf]
        %v557 = vld [vmem:[%s3 + $0x24] sm:$0xf]
        %v558 = vld [vmem:[%s3 + $0x28] sm:$0xf]
        %v559 = vld [vmem:[%s3 + $0x2c] sm:$0xf]
        %v560 = vld [vmem:[%s3 + $0x30] sm:$0xf]
        %v561 = vld [vmem:[%s3 + $0x34] sm:$0xf]
        %v562 = vld [vmem:[%s3 + $0x38] sm:$0xf]
        %v563 = vld [vmem:[%s3 + $0x3c] sm:$0xf]
        %v564 = vld [vmem:[%s4] sm:$0x1]
        %v566 = vlaneseq
        %v567 = vshrl.u32 %v566, 7
        %v568 = vsub.s32 0, %v567
        %v569 = vrot.slane %v564, %v568
        %v587 = vunpack.c.l.b16 %v548
        %v588 = vunpack.c.l.b16 %v549
        %v589 = vunpack.c.l.b16 %v550
        %v590 = vunpack.c.l.b16 %v551
        %v591 = vunpack.c.l.b16 %v552
        %v592 = vunpack.c.l.b16 %v553
        %v593 = vunpack.c.l.b16 %v554
        %v594 = vunpack.c.l.b16 %v555
        %v595 = vunpack.c.l.b16 %v556
        %v596 = vunpack.c.l.b16 %v557
        %v597 = vunpack.c.l.b16 %v558
        %v598 = vunpack.c.l.b16 %v559
        %v599 = vunpack.c.l.b16 %v560
        %v600 = vunpack.c.l.b16 %v561
        %v601 = vunpack.c.l.b16 %v562
        %v602 = vunpack.c.l.b16 %v563
        %v603 = vpack.c.b16 %v588, %v587
        %v604 = vpack.c.b16 %v590, %v589
        %v605 = vpack.c.b16 %v592, %v591
        %v606 = vpack.c.b16 %v594, %v593
        %v607 = vpack.c.b16 %v596, %v595
        %v608 = vpack.c.b16 %v598, %v597
        %v609 = vpack.c.b16 %v600, %v599
        %v610 = vpack.c.b16 %v602, %v601
        %619 = vmatprep.subr.bf16.mxu0 0
        %620 = vmatpush1.bf16.msra.mxu0 %v610
        %621 = vmatprep.subr.bf16.mxu0 0
        %622 = vmatpush1.bf16.msra.mxu0 %v609
        %623 = vmatprep.subr.bf16.mxu0 0
        %624 = vmatpush1.bf16.msra.mxu0 %v608
        %625 = vmatprep.subr.bf16.mxu0 0
        %626 = vmatpush1.bf16.msra.mxu0 %v607
        %627 = vmatprep.subr.bf16.mxu0 0
        %628 = vmatpush1.bf16.msra.mxu0 %v606
        %629 = vmatprep.subr.bf16.mxu0 0
        %630 = vmatpush1.bf16.msra.mxu0 %v605
        %631 = vmatprep.subr.bf16.mxu0 0
        %632 = vmatpush1.bf16.msra.mxu0 %v604
        %633 = vmatprep.subr.bf16.mxu0 0
        %634 = vmatpush1.bf16.msra.mxu0 %v603
        %635 = vmatprep.subr.bf16.mxu0 0
        %636 = vmatpush2.bf16.msra.mxu0 0
        %637 = vmatprep.subr.bf16.mxu0 0
        %638 = vmatpush2.bf16.msra.mxu0 0
        %639 = vmatprep.subr.bf16.mxu0 0
        %640 = vmatpush2.bf16.msra.mxu0 0
        %641 = vmatprep.subr.bf16.mxu0 0
        %642 = vmatpush2.bf16.msra.mxu0 0
        %643 = vmatprep.subr.bf16.mxu0 0
        %644 = vmatpush2.bf16.msra.mxu0 0
        %645 = vmatprep.subr.bf16.mxu0 0
        %646 = vmatpush2.bf16.msra.mxu0 0
        %647 = vmatprep.subr.bf16.mxu0 0
        %648 = vmatpush2.bf16.msra.mxu0 0
        %649 = vmatprep.subr.bf16.mxu0 0
        %650 = vmatpush2.bf16.msra.mxu0 0
        %651 = vmatprep.mubr.bf16.mxu0 0
        %652 = vmatmul.mubr.bf16.gmra.mxu0 %v532
        %v653 = vpop.f32.mrf.mxu0
        %v654 = vadd.f32 %v569, %v653
        %v655 = vpop.f32.mrf.mxu0
        %v656 = vpop.f32.mrf.mxu0
        %v657 = vadd.f32 %v569, %v656
        %v658 = vpop.f32.mrf.mxu0
        %659 = vmatprep.mubr.bf16.mxu0 0
        %660 = vmatmul.mubr.bf16.gmra.mxu0 %v533
        %v661 = vpop.f32.mrf.mxu0
        %v662 = vadd.f32 %v569, %v661
        %v663 = vpop.f32.mrf.mxu0
        %v664 = vpop.f32.mrf.mxu0
        %v665 = vadd.f32 %v569, %v664
        %v666 = vpop.f32.mrf.mxu0
        %667 = vmatprep.mubr.bf16.mxu0 0
        %668 = vmatmul.mubr.bf16.gmra.mxu0 %v534
        %v669 = vpop.f32.mrf.mxu0
        %v670 = vadd.f32 %v569, %v669
        %v671 = vpop.f32.mrf.mxu0
        %v672 = vpop.f32.mrf.mxu0
        %v673 = vadd.f32 %v569, %v672
        %v674 = vpop.f32.mrf.mxu0
        %675 = vmatprep.mubr.bf16.mxu0 0
        %676 = vmatmul.mubr.bf16.gmra.mxu0 %v535
        %v677 = vpop.f32.mrf.mxu0
        %v678 = vadd.f32 %v569, %v677
        %v679 = vpop.f32.mrf.mxu0
        %v680 = vpop.f32.mrf.mxu0
        %v681 = vadd.f32 %v569, %v680
        %v682 = vpop.f32.mrf.mxu0
        %683 = vmatprep.mubr.bf16.mxu0 0
        %684 = vmatmul.mubr.bf16.gmra.mxu0 %v536
        %v685 = vpop.f32.mrf.mxu0
        %v686 = vadd.f32 %v569, %v685
        %v687 = vpop.f32.mrf.mxu0
        %v688 = vpop.f32.mrf.mxu0
        %v689 = vadd.f32 %v569, %v688
        %v690 = vpop.f32.mrf.mxu0
        %691 = vmatprep.mubr.bf16.mxu0 0
        %692 = vmatmul.mubr.bf16.gmra.mxu0 %v537
        %v693 = vpop.f32.mrf.mxu0
        %v694 = vadd.f32 %v569, %v693
        %v695 = vpop.f32.mrf.mxu0
        %v696 = vpop.f32.mrf.mxu0
        %v697 = vadd.f32 %v569, %v696
        %v698 = vpop.f32.mrf.mxu0
        %699 = vmatprep.mubr.bf16.mxu0 0
        %700 = vmatmul.mubr.bf16.gmra.mxu0 %v538
        %v701 = vpop.f32.mrf.mxu0
        %v702 = vadd.f32 %v569, %v701
        %v703 = vpop.f32.mrf.mxu0
        %v704 = vpop.f32.mrf.mxu0
        %v705 = vadd.f32 %v569, %v704
        %v706 = vpop.f32.mrf.mxu0
        %707 = vmatprep.mubr.bf16.mxu0 0
        %708 = vmatmul.mubr.bf16.gmra.mxu0 %v539
        %v709 = vpop.f32.mrf.mxu0
        %v710 = vadd.f32 %v569, %v709
        %v711 = vpop.f32.mrf.mxu0
        %v712 = vpop.f32.mrf.mxu0
        %v713 = vadd.f32 %v569, %v712
        %v714 = vpop.f32.mrf.mxu0
        %715 = vmatprep.mubr.bf16.mxu0 0
        %716 = vmatmul.mubr.bf16.gmra.mxu0 %v540
        %v717 = vpop.f32.mrf.mxu0
        %v718 = vadd.f32 %v569, %v717
        %v719 = vpop.f32.mrf.mxu0
        %v720 = vpop.f32.mrf.mxu0
        %v721 = vadd.f32 %v569, %v720
        %v722 = vpop.f32.mrf.mxu0
        %723 = vmatprep.mubr.bf16.mxu0 0
        %724 = vmatmul.mubr.bf16.gmra.mxu0 %v541
        %v725 = vpop.f32.mrf.mxu0
        %v726 = vadd.f32 %v569, %v725
        %v727 = vpop.f32.mrf.mxu0
        %v728 = vpop.f32.mrf.mxu0
        %v729 = vadd.f32 %v569, %v728
        %v730 = vpop.f32.mrf.mxu0
        %731 = vmatprep.mubr.bf16.mxu0 0
        %732 = vmatmul.mubr.bf16.gmra.mxu0 %v542
        %v733 = vpop.f32.mrf.mxu0
        %v734 = vadd.f32 %v569, %v733
        %v735 = vpop.f32.mrf.mxu0
        %v736 = vpop.f32.mrf.mxu0
        %v737 = vadd.f32 %v569, %v736
        %v738 = vpop.f32.mrf.mxu0
        %739 = vmatprep.mubr.bf16.mxu0 0
        %740 = vmatmul.mubr.bf16.gmra.mxu0 %v543
        %v741 = vpop.f32.mrf.mxu0
        %v742 = vadd.f32 %v569, %v741
        %v743 = vpop.f32.mrf.mxu0
        %v744 = vpop.f32.mrf.mxu0
        %v745 = vadd.f32 %v569, %v744
        %v746 = vpop.f32.mrf.mxu0
        %747 = vmatprep.mubr.bf16.mxu0 0
        %748 = vmatmul.mubr.bf16.gmra.mxu0 %v544
        %v749 = vpop.f32.mrf.mxu0
        %v750 = vadd.f32 %v569, %v749
        %v751 = vpop.f32.mrf.mxu0
        %v752 = vpop.f32.mrf.mxu0
        %v753 = vadd.f32 %v569, %v752
        %v754 = vpop.f32.mrf.mxu0
        %755 = vmatprep.mubr.bf16.mxu0 0
        %756 = vmatmul.mubr.bf16.gmra.mxu0 %v545
        %v757 = vpop.f32.mrf.mxu0
        %v758 = vadd.f32 %v569, %v757
        %v759 = vpop.f32.mrf.mxu0
        %v760 = vpop.f32.mrf.mxu0
        %v761 = vadd.f32 %v569, %v760
        %v762 = vpop.f32.mrf.mxu0
        %763 = vmatprep.mubr.bf16.mxu0 0
        %764 = vmatmul.mubr.bf16.gmra.mxu0 %v546
        %v765 = vpop.f32.mrf.mxu0
        %v766 = vadd.f32 %v569, %v765
        %v767 = vpop.f32.mrf.mxu0
        %v768 = vpop.f32.mrf.mxu0
        %v769 = vadd.f32 %v569, %v768
        %v770 = vpop.f32.mrf.mxu0
        %771 = vmatprep.mubr.bf16.mxu0 0
        %772 = vmatmul.mubr.bf16.gmra.mxu0 %v547
        %v773 = vpop.f32.mrf.mxu0
        %v774 = vadd.f32 %v569, %v773
        %v775 = vpop.f32.mrf.mxu0
        %v776 = vpop.f32.mrf.mxu0
        %v777 = vadd.f32 %v569, %v776
        %v778 = vpop.f32.mrf.mxu0
        %779 = vdwg.mxu0
        %v780 = vlaneseq
        %v781 = vand.u32 %v780, 127
        %vm782 = vcmp.lt.s32.totalorder %v781, 8
        %v783 = vsel %vm782, %v654, -1e+30
        %v784 = vsel %vm782, %v657, -1e+30
        %v785 = vsel %vm782, %v662, -1e+30
        %v786 = vsel %vm782, %v665, -1e+30
        %v787 = vsel %vm782, %v670, -1e+30
        %v788 = vsel %vm782, %v673, -1e+30
        %v789 = vsel %vm782, %v678, -1e+30
        %v790 = vsel %vm782, %v681, -1e+30
        %v791 = vsel %vm782, %v686, -1e+30
        %v792 = vsel %vm782, %v689, -1e+30
        %v793 = vsel %vm782, %v694, -1e+30
        %v794 = vsel %vm782, %v697, -1e+30
        %v795 = vsel %vm782, %v702, -1e+30
        %v796 = vsel %vm782, %v705, -1e+30
        %v797 = vsel %vm782, %v710, -1e+30
        %v798 = vsel %vm782, %v713, -1e+30
        %v799 = vsel %vm782, %v718, -1e+30
        %v800 = vsel %vm782, %v721, -1e+30
        %v801 = vsel %vm782, %v726, -1e+30
        %v802 = vsel %vm782, %v729, -1e+30
        %v803 = vsel %vm782, %v734, -1e+30
        %v804 = vsel %vm782, %v737, -1e+30
        %v805 = vsel %vm782, %v742, -1e+30
        %v806 = vsel %vm782, %v745, -1e+30
        %v807 = vsel %vm782, %v750, -1e+30
        %v808 = vsel %vm782, %v753, -1e+30
        %v809 = vsel %vm782, %v758, -1e+30
        %v810 = vsel %vm782, %v761, -1e+30
        %v811 = vsel %vm782, %v766, -1e+30
        %v812 = vsel %vm782, %v769, -1e+30
        %v813 = vsel %vm782, %v774, -1e+30
        %v814 = vsel %vm782, %v777, -1e+30
        %815 = vmax.xlane.f32.xlu0 %v783
        %v816 = vpop.xlane.xlu0 %815
        %817 = vmax.xlane.f32.xlu0 %v784
        %v818 = vpop.xlane.xlu0 %817
        %819 = vmax.xlane.f32.xlu0 %v785
        %v820 = vpop.xlane.xlu0 %819
        %821 = vmax.xlane.f32.xlu0 %v786
        %v822 = vpop.xlane.xlu0 %821
        %823 = vmax.xlane.f32.xlu0 %v787
        %v824 = vpop.xlane.xlu0 %823
        %825 = vmax.xlane.f32.xlu0 %v788
        %v826 = vpop.xlane.xlu0 %825
        %827 = vmax.xlane.f32.xlu0 %v789
        %v828 = vpop.xlane.xlu0 %827
        %829 = vmax.xlane.f32.xlu0 %v790
        %v830 = vpop.xlane.xlu0 %829
        %831 = vmax.xlane.f32.xlu0 %v791
        %v832 = vpop.xlane.xlu0 %831
        %833 = vmax.xlane.f32.xlu0 %v792
        %v834 = vpop.xlane.xlu0 %833
        %835 = vmax.xlane.f32.xlu0 %v793
        %v836 = vpop.xlane.xlu0 %835
        %837 = vmax.xlane.f32.xlu0 %v794
        %v838 = vpop.xlane.xlu0 %837
        %839 = vmax.xlane.f32.xlu0 %v795
        %v840 = vpop.xlane.xlu0 %839
        %841 = vmax.xlane.f32.xlu0 %v796
        %v842 = vpop.xlane.xlu0 %841
        %843 = vmax.xlane.f32.xlu0 %v797
        %v844 = vpop.xlane.xlu0 %843
        %845 = vmax.xlane.f32.xlu0 %v798
        %v846 = vpop.xlane.xlu0 %845
        %847 = vmax.xlane.f32.xlu0 %v799
        %v848 = vpop.xlane.xlu0 %847
        %849 = vmax.xlane.f32.xlu0 %v800
        %v850 = vpop.xlane.xlu0 %849
        %851 = vmax.xlane.f32.xlu0 %v801
        %v852 = vpop.xlane.xlu0 %851
        %853 = vmax.xlane.f32.xlu0 %v802
        %v854 = vpop.xlane.xlu0 %853
        %855 = vmax.xlane.f32.xlu0 %v803
        %v856 = vpop.xlane.xlu0 %855
        %857 = vmax.xlane.f32.xlu0 %v804
        %v858 = vpop.xlane.xlu0 %857
        %859 = vmax.xlane.f32.xlu0 %v805
        %v860 = vpop.xlane.xlu0 %859
        %861 = vmax.xlane.f32.xlu0 %v806
        %v862 = vpop.xlane.xlu0 %861
        %863 = vmax.xlane.f32.xlu0 %v807
        %v864 = vpop.xlane.xlu0 %863
        %865 = vmax.xlane.f32.xlu0 %v808
        %v866 = vpop.xlane.xlu0 %865
        %867 = vmax.xlane.f32.xlu0 %v809
        %v868 = vpop.xlane.xlu0 %867
        %869 = vmax.xlane.f32.xlu0 %v810
        %v870 = vpop.xlane.xlu0 %869
        %871 = vmax.xlane.f32.xlu0 %v811
        %v872 = vpop.xlane.xlu0 %871
        %873 = vmax.xlane.f32.xlu0 %v812
        %v874 = vpop.xlane.xlu0 %873
        %875 = vmax.xlane.f32.xlu0 %v813
        %v876 = vpop.xlane.xlu0 %875
        %877 = vmax.xlane.f32.xlu0 %v814
        %v878 = vpop.xlane.xlu0 %877
        %v879 = vsub.f32 %v783, %v816
        %v880 = vsub.f32 %v784, %v818
        %v881 = vsub.f32 %v785, %v820
        %v882 = vsub.f32 %v786, %v822
        %v883 = vsub.f32 %v787, %v824
        %v884 = vsub.f32 %v788, %v826
        %v885 = vsub.f32 %v789, %v828
        %v886 = vsub.f32 %v790, %v830
        %v887 = vsub.f32 %v791, %v832
        %v888 = vsub.f32 %v792, %v834
        %v889 = vsub.f32 %v793, %v836
        %v890 = vsub.f32 %v794, %v838
        %v891 = vsub.f32 %v795, %v840
        %v892 = vsub.f32 %v796, %v842
        %v893 = vsub.f32 %v797, %v844
        %v894 = vsub.f32 %v798, %v846
        %v895 = vsub.f32 %v799, %v848
        %v896 = vsub.f32 %v800, %v850
        %v897 = vsub.f32 %v801, %v852
        %v898 = vsub.f32 %v802, %v854
        %v899 = vsub.f32 %v803, %v856
        %v900 = vsub.f32 %v804, %v858
        %v901 = vsub.f32 %v805, %v860
        %v902 = vsub.f32 %v806, %v862
        %v903 = vsub.f32 %v807, %v864
        %v904 = vsub.f32 %v808, %v866
        %v905 = vsub.f32 %v809, %v868
        %v906 = vsub.f32 %v810, %v870
        %v907 = vsub.f32 %v811, %v872
        %v908 = vsub.f32 %v812, %v874
        %v909 = vsub.f32 %v813, %v876
        %v910 = vsub.f32 %v814, %v878
        %v911 = vmul.f32 %v879, 1.442695
        %v912 = vpow.pop %v911
        %v913 = vmul.f32 %v880, 1.442695
        %v914 = vpow.pop %v913
        %v915 = vmul.f32 %v881, 1.442695
        %v916 = vpow.pop %v915
        %v917 = vmul.f32 %v882, 1.442695
        %v918 = vpow.pop %v917
        %v919 = vmul.f32 %v883, 1.442695
        %v920 = vpow.pop %v919
        %v921 = vmul.f32 %v884, 1.442695
        %v922 = vpow.pop %v921
        %v923 = vmul.f32 %v885, 1.442695
        %v924 = vpow.pop %v923
        %v925 = vmul.f32 %v886, 1.442695
        %v926 = vpow.pop %v925
        %v927 = vmul.f32 %v887, 1.442695
        %v928 = vpow.pop %v927
        %v929 = vmul.f32 %v888, 1.442695
        %v930 = vpow.pop %v929
        %v931 = vmul.f32 %v889, 1.442695
        %v932 = vpow.pop %v931
        %v933 = vmul.f32 %v890, 1.442695
        %v934 = vpow.pop %v933
        %v935 = vmul.f32 %v891, 1.442695
        %v936 = vpow.pop %v935
        %v937 = vmul.f32 %v892, 1.442695
        %v938 = vpow.pop %v937
        %v939 = vmul.f32 %v893, 1.442695
        %v940 = vpow.pop %v939
        %v941 = vmul.f32 %v894, 1.442695
        %v942 = vpow.pop %v941
        %v943 = vmul.f32 %v895, 1.442695
        %v944 = vpow.pop %v943
        %v945 = vmul.f32 %v896, 1.442695
        %v946 = vpow.pop %v945
        %v947 = vmul.f32 %v897, 1.442695
        %v948 = vpow.pop %v947
        %v949 = vmul.f32 %v898, 1.442695
        %v950 = vpow.pop %v949
        %v951 = vmul.f32 %v899, 1.442695
        %v952 = vpow.pop %v951
        %v953 = vmul.f32 %v900, 1.442695
        %v954 = vpow.pop %v953
        %v955 = vmul.f32 %v901, 1.442695
        %v956 = vpow.pop %v955
        %v957 = vmul.f32 %v902, 1.442695
        %v958 = vpow.pop %v957
        %v959 = vmul.f32 %v903, 1.442695
        %v960 = vpow.pop %v959
        %v961 = vmul.f32 %v904, 1.442695
        %v962 = vpow.pop %v961
        %v963 = vmul.f32 %v905, 1.442695
        %v964 = vpow.pop %v963
        %v965 = vmul.f32 %v906, 1.442695
        %v966 = vpow.pop %v965
        %v967 = vmul.f32 %v907, 1.442695
        %v968 = vpow.pop %v967
        %v969 = vmul.f32 %v908, 1.442695
        %v970 = vpow.pop %v969
        %v971 = vmul.f32 %v909, 1.442695
        %v972 = vpow.pop %v971
        %v973 = vmul.f32 %v910, 1.442695
        %v974 = vpow.pop %v973
        %975 = vadd.xlane.f32.xlu0 %v912
        %v976 = vpop.xlane.xlu0 %975
        %977 = vadd.xlane.f32.xlu0 %v914
        %v978 = vpop.xlane.xlu0 %977
        %979 = vadd.xlane.f32.xlu0 %v916
        %v980 = vpop.xlane.xlu0 %979
        %981 = vadd.xlane.f32.xlu0 %v918
        %v982 = vpop.xlane.xlu0 %981
        %983 = vadd.xlane.f32.xlu0 %v920
        %v984 = vpop.xlane.xlu0 %983
        %985 = vadd.xlane.f32.xlu0 %v922
        %v986 = vpop.xlane.xlu0 %985
        %987 = vadd.xlane.f32.xlu0 %v924
        %v988 = vpop.xlane.xlu0 %987
        %989 = vadd.xlane.f32.xlu0 %v926
        %v990 = vpop.xlane.xlu0 %989
        %991 = vadd.xlane.f32.xlu0 %v928
        %v992 = vpop.xlane.xlu0 %991
        %993 = vadd.xlane.f32.xlu0 %v930
        %v994 = vpop.xlane.xlu0 %993
        %995 = vadd.xlane.f32.xlu0 %v932
        %v996 = vpop.xlane.xlu0 %995
        %997 = vadd.xlane.f32.xlu0 %v934
        %v998 = vpop.xlane.xlu0 %997
        %999 = vadd.xlane.f32.xlu0 %v936
        %v1000 = vpop.xlane.xlu0 %999
        %1001 = vadd.xlane.f32.xlu0 %v938
        %v1002 = vpop.xlane.xlu0 %1001
        %1003 = vadd.xlane.f32.xlu0 %v940
        %v1004 = vpop.xlane.xlu0 %1003
        %1005 = vadd.xlane.f32.xlu0 %v942
        %v1006 = vpop.xlane.xlu0 %1005
        %1007 = vadd.xlane.f32.xlu0 %v944
        %v1008 = vpop.xlane.xlu0 %1007
        %1009 = vadd.xlane.f32.xlu0 %v946
        %v1010 = vpop.xlane.xlu0 %1009
        %1011 = vadd.xlane.f32.xlu0 %v948
        %v1012 = vpop.xlane.xlu0 %1011
        %1013 = vadd.xlane.f32.xlu0 %v950
        %v1014 = vpop.xlane.xlu0 %1013
        %1015 = vadd.xlane.f32.xlu0 %v952
        %v1016 = vpop.xlane.xlu0 %1015
        %1017 = vadd.xlane.f32.xlu0 %v954
        %v1018 = vpop.xlane.xlu0 %1017
        %1019 = vadd.xlane.f32.xlu0 %v956
        %v1020 = vpop.xlane.xlu0 %1019
        %1021 = vadd.xlane.f32.xlu0 %v958
        %v1022 = vpop.xlane.xlu0 %1021
        %1023 = vadd.xlane.f32.xlu0 %v960
        %v1024 = vpop.xlane.xlu0 %1023
        %1025 = vadd.xlane.f32.xlu0 %v962
        %v1026 = vpop.xlane.xlu0 %1025
        %1027 = vadd.xlane.f32.xlu0 %v964
        %v1028 = vpop.xlane.xlu0 %1027
        %1029 = vadd.xlane.f32.xlu0 %v966
        %v1030 = vpop.xlane.xlu0 %1029
        %1031 = vadd.xlane.f32.xlu0 %v968
        %v1032 = vpop.xlane.xlu0 %1031
        %1033 = vadd.xlane.f32.xlu0 %v970
        %v1034 = vpop.xlane.xlu0 %1033
        %1035 = vadd.xlane.f32.xlu0 %v972
        %v1036 = vpop.xlane.xlu0 %1035
        %1037 = vadd.xlane.f32.xlu0 %v974
        %v1038 = vpop.xlane.xlu0 %1037
        %v1039 = vrcp.pop %v976
        %v1040 = vrcp.pop %v978
        %v1041 = vrcp.pop %v980
        %v1042 = vrcp.pop %v982
        %v1043 = vrcp.pop %v984
        %v1044 = vrcp.pop %v986
        %v1045 = vrcp.pop %v988
        %v1046 = vrcp.pop %v990
        %v1047 = vrcp.pop %v992
        %v1048 = vrcp.pop %v994
        %v1049 = vrcp.pop %v996
        %v1050 = vrcp.pop %v998
        %v1051 = vrcp.pop %v1000
        %v1052 = vrcp.pop %v1002
        %v1053 = vrcp.pop %v1004
        %v1054 = vrcp.pop %v1006
        %v1055 = vrcp.pop %v1008
        %v1056 = vrcp.pop %v1010
        %v1057 = vrcp.pop %v1012
        %v1058 = vrcp.pop %v1014
        %v1059 = vrcp.pop %v1016
        %v1060 = vrcp.pop %v1018
        %v1061 = vrcp.pop %v1020
        %v1062 = vrcp.pop %v1022
        %v1063 = vrcp.pop %v1024
        %v1064 = vrcp.pop %v1026
        %v1065 = vrcp.pop %v1028
        %v1066 = vrcp.pop %v1030
        %v1067 = vrcp.pop %v1032
        %v1068 = vrcp.pop %v1034
        %v1069 = vrcp.pop %v1036
        %v1070 = vrcp.pop %v1038
        %v1071 = vmul.f32 %v912, %v1039
        %v1072 = vmul.f32 %v914, %v1040
        %v1073 = vmul.f32 %v916, %v1041
        %v1074 = vmul.f32 %v918, %v1042
        %v1075 = vmul.f32 %v920, %v1043
        %v1076 = vmul.f32 %v922, %v1044
        %v1077 = vmul.f32 %v924, %v1045
        %v1078 = vmul.f32 %v926, %v1046
        %v1079 = vmul.f32 %v928, %v1047
        %v1080 = vmul.f32 %v930, %v1048
        %v1081 = vmul.f32 %v932, %v1049
        %v1082 = vmul.f32 %v934, %v1050
        %v1083 = vmul.f32 %v936, %v1051
        %v1084 = vmul.f32 %v938, %v1052
        %v1085 = vmul.f32 %v940, %v1053
        %v1086 = vmul.f32 %v942, %v1054
        %v1087 = vmul.f32 %v944, %v1055
        %v1088 = vmul.f32 %v946, %v1056
        %v1089 = vmul.f32 %v948, %v1057
        %v1090 = vmul.f32 %v950, %v1058
        %v1091 = vmul.f32 %v952, %v1059
        %v1092 = vmul.f32 %v954, %v1060
        %v1093 = vmul.f32 %v956, %v1061
        %v1094 = vmul.f32 %v958, %v1062
        %v1095 = vmul.f32 %v960, %v1063
        %v1096 = vmul.f32 %v962, %v1064
        %v1097 = vmul.f32 %v964, %v1065
        %v1098 = vmul.f32 %v966, %v1066
        %v1099 = vmul.f32 %v968, %v1067
        %v1100 = vmul.f32 %v970, %v1068
        %v1101 = vmul.f32 %v972, %v1069
        %v1102 = vmul.f32 %v974, %v1070
        %v1103 = vpack.c.bf16 %v1072, %v1071
        %v1104 = vpack.c.bf16 %v1074, %v1073
        %v1105 = vpack.c.bf16 %v1076, %v1075
        %v1106 = vpack.c.bf16 %v1078, %v1077
        %v1107 = vpack.c.bf16 %v1080, %v1079
        %v1108 = vpack.c.bf16 %v1082, %v1081
        %v1109 = vpack.c.bf16 %v1084, %v1083
        %v1110 = vpack.c.bf16 %v1086, %v1085
        %v1111 = vpack.c.bf16 %v1088, %v1087
        %v1112 = vpack.c.bf16 %v1090, %v1089
        %v1113 = vpack.c.bf16 %v1092, %v1091
        %v1114 = vpack.c.bf16 %v1094, %v1093
        %v1115 = vpack.c.bf16 %v1096, %v1095
        %v1116 = vpack.c.bf16 %v1098, %v1097
        %v1117 = vpack.c.bf16 %v1100, %v1099
        %v1118 = vpack.c.bf16 %v1102, %v1101
        %v1135 = vunpack.c.l.b16 %v1103
        %v1136 = vunpack.c.h.b16 %v1103
        %v1137 = vunpack.c.l.b16 %v1104
        %v1138 = vunpack.c.h.b16 %v1104
        %v1139 = vunpack.c.l.b16 %v1105
        %v1140 = vunpack.c.h.b16 %v1105
        %v1141 = vunpack.c.l.b16 %v1106
        %v1142 = vunpack.c.h.b16 %v1106
        %v1143 = vunpack.c.l.b16 %v1107
        %v1144 = vunpack.c.h.b16 %v1107
        %v1145 = vunpack.c.l.b16 %v1108
        %v1146 = vunpack.c.h.b16 %v1108
        %v1147 = vunpack.c.l.b16 %v1109
        %v1148 = vunpack.c.h.b16 %v1109
        %v1149 = vunpack.c.l.b16 %v1110
        %v1150 = vunpack.c.h.b16 %v1110
        %v1151 = vunpack.c.l.b16 %v1111
        %v1152 = vunpack.c.h.b16 %v1111
        %v1153 = vunpack.c.l.b16 %v1112
        %v1154 = vunpack.c.h.b16 %v1112
        %v1155 = vunpack.c.l.b16 %v1113
        %v1156 = vunpack.c.h.b16 %v1113
        %v1157 = vunpack.c.l.b16 %v1114
        %v1158 = vunpack.c.h.b16 %v1114
        %v1159 = vunpack.c.l.b16 %v1115
        %v1160 = vunpack.c.h.b16 %v1115
        %v1161 = vunpack.c.l.b16 %v1116
        %v1162 = vunpack.c.h.b16 %v1116
        %v1163 = vunpack.c.l.b16 %v1117
        %v1164 = vunpack.c.h.b16 %v1117
        %v1165 = vunpack.c.l.b16 %v1118
        %v1166 = vunpack.c.h.b16 %v1118
        %v1167 = vpack.c.b16 %v1135, %v1135
        %v1168 = vpack.c.b16 %v1136, %v1136
        %v1169 = vpack.c.b16 %v1137, %v1137
        %v1170 = vpack.c.b16 %v1138, %v1138
        %v1171 = vpack.c.b16 %v1139, %v1139
        %v1172 = vpack.c.b16 %v1140, %v1140
        %v1173 = vpack.c.b16 %v1141, %v1141
        %v1174 = vpack.c.b16 %v1142, %v1142
        %v1175 = vpack.c.b16 %v1143, %v1143
        %v1176 = vpack.c.b16 %v1144, %v1144
        %v1177 = vpack.c.b16 %v1145, %v1145
        %v1178 = vpack.c.b16 %v1146, %v1146
        %v1179 = vpack.c.b16 %v1147, %v1147
        %v1180 = vpack.c.b16 %v1148, %v1148
        %v1181 = vpack.c.b16 %v1149, %v1149
        %v1182 = vpack.c.b16 %v1150, %v1150
        %v1183 = vpack.c.b16 %v1151, %v1151
        %v1184 = vpack.c.b16 %v1152, %v1152
        %v1185 = vpack.c.b16 %v1153, %v1153
        %v1186 = vpack.c.b16 %v1154, %v1154
        %v1187 = vpack.c.b16 %v1155, %v1155
        %v1188 = vpack.c.b16 %v1156, %v1156
        %v1189 = vpack.c.b16 %v1157, %v1157
        %v1190 = vpack.c.b16 %v1158, %v1158
        %v1191 = vpack.c.b16 %v1159, %v1159
        %v1192 = vpack.c.b16 %v1160, %v1160
        %v1193 = vpack.c.b16 %v1161, %v1161
        %v1194 = vpack.c.b16 %v1162, %v1162
        %v1195 = vpack.c.b16 %v1163, %v1163
        %v1196 = vpack.c.b16 %v1164, %v1164
        %v1197 = vpack.c.b16 %v1165, %v1165
        %v1198 = vpack.c.b16 %v1166, %v1166
        %1231 = vst [vmem:[%s218] sm:$0xf] %v1167
        %1232 = vst [vmem:[%s218 + $0x4] sm:$0xf] %v1168
        %1233 = vst [vmem:[%s218 + $0x8] sm:$0xf] %v1169
        %1234 = vst [vmem:[%s218 + $0xc] sm:$0xf] %v1170
        %1235 = vst [vmem:[%s218 + $0x10] sm:$0xf] %v1171
        %1236 = vst [vmem:[%s218 + $0x14] sm:$0xf] %v1172
        %1237 = vst [vmem:[%s218 + $0x18] sm:$0xf] %v1173
        %1238 = vst [vmem:[%s218 + $0x1c] sm:$0xf] %v1174
        %1239 = vst [vmem:[%s218 + $0x20] sm:$0xf] %v1175
        %1240 = vst [vmem:[%s218 + $0x24] sm:$0xf] %v1176
        %1241 = vst [vmem:[%s218 + $0x28] sm:$0xf] %v1177
        %1242 = vst [vmem:[%s218 + $0x2c] sm:$0xf] %v1178
        %1243 = vst [vmem:[%s218 + $0x30] sm:$0xf] %v1179
        %1244 = vst [vmem:[%s218 + $0x34] sm:$0xf] %v1180
        %1245 = vst [vmem:[%s218 + $0x38] sm:$0xf] %v1181
        %1246 = vst [vmem:[%s218 + $0x3c] sm:$0xf] %v1182
        %1247 = vst [vmem:[%s218 + $0x40] sm:$0xf] %v1183
        %1248 = vst [vmem:[%s218 + $0x44] sm:$0xf] %v1184
        %1249 = vst [vmem:[%s218 + $0x48] sm:$0xf] %v1185
        %1250 = vst [vmem:[%s218 + $0x4c] sm:$0xf] %v1186
        %1251 = vst [vmem:[%s218 + $0x50] sm:$0xf] %v1187
        %1252 = vst [vmem:[%s218 + $0x54] sm:$0xf] %v1188
        %1253 = vst [vmem:[%s218 + $0x58] sm:$0xf] %v1189
        %1254 = vst [vmem:[%s218 + $0x5c] sm:$0xf] %v1190
        %1255 = vst [vmem:[%s218 + $0x60] sm:$0xf] %v1191
        %1256 = vst [vmem:[%s218 + $0x64] sm:$0xf] %v1192
        %1257 = vst [vmem:[%s218 + $0x68] sm:$0xf] %v1193
        %1258 = vst [vmem:[%s218 + $0x6c] sm:$0xf] %v1194
        %1259 = vst [vmem:[%s218 + $0x70] sm:$0xf] %v1195
        %1260 = vst [vmem:[%s218 + $0x74] sm:$0xf] %v1196
        %1261 = vst [vmem:[%s218 + $0x78] sm:$0xf] %v1197
        %1262 = vst [vmem:[%s218 + $0x7c] sm:$0xf] %v1198
        %s1263 = sand.u32 %s137, 1
        %s1264 = scalar_lea.sflag [#allocation3], %s1263
        %s1265 = sand.u32 %s137, 1
        %s1266 = smul.addr %s1265, 128
        %s1267 = scalar_lea.vmem [#allocation2], %s1266
        // Predicated region
        $region41: #{tpu_custom_call.1} parent=39 // pred_check
          %p1268 = pneg %p147
        $region42: #{tpu_custom_call.1} parent=39 // pred_check_branch
          %1270 = sbr.rel (%p1268) target = $region44
        $region43: #{tpu_custom_call.1} parent=39 // pred_region
          %s1271 = smul.u32 32, %s19
          %s1273 = ssub.s32 2048, 2048
          %1274 = vsyncadd %s1264, %s1273
          %s1275 = smul.addr %s1271, 64
          %s1276 = scalar_lea.hbm %s5, %s1275
          %s1277 = sshll.u32 %s1267, 4
          %s1278 = int_to_ptr.vmem [resolvable:$true] %s1277
          %1283 = dma.vmem_to_hbm [thread:$0]  %s1278, 2048, %s1276, %s1264, 64, 64, 4
        $region44: #{tpu_custom_call.1} parent=39 // pred_fallthru
          _
      $region40: #{tpu_custom_call.1} parent=5 // pred_fallthru
        _
      %p1284 = scmp.le.s32.totalorder 2, %s14
      // Predicated region
      $region45: #{tpu_custom_call.1} parent=5 // pred_check
        %p1285 = pneg %p1284
      $region46: #{tpu_custom_call.1} parent=5 // pred_check_branch
        %1287 = sbr.rel (%p1285) target = $region48
      $region47: #{tpu_custom_call.1} parent=5 // pred_region
        %s1288 = ssub.s32 %s14, 2
        // Predicated region
        $region49: #{tpu_custom_call.1} parent=47 // pred_check
          %p1289 = pneg %p153
        $region50: #{tpu_custom_call.1} parent=47 // pred_check_branch
          %1291 = sbr.rel (%p1289) target = $region52
        $region51: #{tpu_custom_call.1} parent=47 // pred_region
          %s1292 = sand.u32 %s138, 1
          %s1293 = scalar_lea.sflag [#allocation3], %s1292
          %s1294 = sand.u32 %s138, 1
          %s1295 = smul.addr %s1294, 128
          %s1296 = scalar_lea.vmem [#allocation2], %s1295
          %1297 = dma.done %s1293, 2048
        $region52: #{tpu_custom_call.1} parent=47 // pred_fallthru
          _
      $region48: #{tpu_custom_call.1} parent=5 // pred_fallthru
        _
    $region6: #{tpu_custom_call.1} parent=1 // loop_footer
      %s18 = sadd.s32 1, %s14
    $region7: #{tpu_custom_call.1} parent=1 // loop_footer_branch
      %13 = sbr.rel target = $region3
    $region8: #{tpu_custom_call.1} parent=1 // loop_exit
      _
    %1298 = vsyncpa [#allocation3], 1
    %s1299 = scalar_lea.sflag [#allocation3], 1
    %1300 = vsyncpa %s1299, 1

</llo_original>
